<compile_context>
chip_gen: v6e
topology: v6e:2x2x1
jax: 0.10.0
libtpu: 0.0.40
codegen_flags: <defaults>
</compile_context>

<pallas_src>
import jax
import jax.numpy as jnp
from jax import lax
from jax.experimental import pallas as pl
from jax.experimental.pallas import tpu as pltpu


def _prediction_kernel(x_ref,      # (T*B, D)  time-major, flattened
                       wih_ref,    # (D, 4H)   weight_ih.T, gate order [i, f, o, g]
                       whh_ref,    # (H, 4H)   weight_hh.T, gate order [i, f, o, g]
                       b_ref,      # (1, 4H)   bias_ih + bias_hh, gate order [i, f, o, g]
                       lnw_ref,    # (1, H)    LayerNorm weight
                       lnb_ref,    # (1, H)    LayerNorm bias
                       wh_ref,     # (H, 2)    [fc_mean.weight ; fc_log_std.weight].T
                       bh_ref,     # (1, 2)    [fc_mean.bias, fc_log_std.bias]
                       out_ref):   # (B, 2)    [:, 0] = mean, [:, 1] = log_std
    TB, _ = x_ref.shape
    B = out_ref.shape[0]
    H = lnw_ref.shape[-1]
    T = TB // B

    # Hoist the input projection out of the recurrence: one MXU push for all timesteps,
    # bias broadcast-added exactly once.
    xz = (jnp.dot(x_ref[...], wih_ref[...], preferred_element_type=jnp.float32)
          + b_ref[...])                                          # (T*B, 4H)

    # Loop-invariant recurrent weight: load once.
    w_hh = whh_ref[...]                                          # (H, 4H)

    # h / c live in vregs as loop-carried values; T is static -> fully unrolled.
    h = jnp.zeros((B, H), jnp.float32)
    c = jnp.zeros((B, H), jnp.float32)
    for t in range(T):
        z = xz[t * B:(t + 1) * B, :] + jnp.dot(h, w_hh, preferred_element_type=jnp.float32)
        zs = jax.nn.sigmoid(z)                                   # one full-vreg EUP pass (i,f,o)
        i_g = zs[:, 0 * H:1 * H]
        f_g = zs[:, 1 * H:2 * H]
        o_g = zs[:, 2 * H:3 * H]
        g_g = jnp.tanh(z[:, 3 * H:4 * H])                        # single tanh for g
        c = f_g * c + i_g * g_g
        h = o_g * jnp.tanh(c)

    # out = out[:, -1, :]  -> final hidden state; LayerNorm over H (eps = 1e-5, PyTorch default)
    mu = jnp.mean(h, axis=-1, keepdims=True)
    var = jnp.mean((h - mu) ** 2, axis=-1, keepdims=True)
    y = (h - mu) * lax.rsqrt(var + 1e-5)
    y = y * lnw_ref[...] + lnb_ref[...]                          # (B, H)

    # Fused heads: one GEMM, one output store.
    out_ref[...] = (jnp.dot(y, wh_ref[...], preferred_element_type=jnp.float32)
                    + bh_ref[...])                               # (B, 2)


def _reorder_gates_rows(w):
    """PyTorch gate order along dim 0 is [i, f, g, o]; permute to [i, f, o, g]."""
    H = w.shape[0] // 4
    return jnp.concatenate([w[0:H], w[H:2 * H], w[3 * H:4 * H], w[2 * H:3 * H]], axis=0)


@jax.jit
def prediction_network_forward(x, params):
    """x: (B, T, D) float32 (batch_first, like the PyTorch module)."""
    B, T, D = x.shape
    H = params["weight_hh_l0"].shape[1]

    # Time-major, flattened for the single hoisted input-projection matmul.
    x_tm = jnp.transpose(x, (1, 0, 2)).reshape(T * B, D).astype(jnp.float32)

    wih_t = _reorder_gates_rows(params["weight_ih_l0"]).T.astype(jnp.float32)   # (D, 4H)
    whh_t = _reorder_gates_rows(params["weight_hh_l0"]).T.astype(jnp.float32)   # (H, 4H)
    bias = _reorder_gates_rows(
        (params["bias_ih_l0"] + params["bias_hh_l0"]).reshape(4 * H, 1)
    ).reshape(1, 4 * H).astype(jnp.float32)

    ln_w = params["ln_weight"].reshape(1, H).astype(jnp.float32)
    ln_b = params["ln_bias"].reshape(1, H).astype(jnp.float32)

    # Fuse the two 1-wide heads into one (H, 2) weight and (1, 2) bias.
    w_heads = jnp.concatenate([params["fc_mean_w"], params["fc_log_std_w"]],
                              axis=0).T.astype(jnp.float32)                     # (H, 2)
    b_heads = jnp.concatenate([params["fc_mean_b"], params["fc_log_std_b"]],
                              axis=0).reshape(1, 2).astype(jnp.float32)         # (1, 2)

    vmem = pl.BlockSpec(memory_space=pltpu.MemorySpace.VMEM)
    out = pl.pallas_call(
        _prediction_kernel,
        out_shape=jax.ShapeDtypeStruct((B, 2), jnp.float32),
        in_specs=[vmem] * 8,
        out_specs=vmem,
        # TODO(synk): at real batch sizes, add a grid over B tiles with
        # dimension_semantics=("parallel",) so v7x's 2 TensorCores both work.
    )(x_tm, wih_t, whh_t, bias, ln_w, ln_b, w_heads, b_heads)

    return out[:, 0], out[:, 1]                                  # (mean, log_std), .squeeze(-1)


def _reference_forward(x, params):
    """Pure-JAX reference of the same PyTorch semantics (for validation)."""
    B, T, D = x.shape
    H = params["weight_hh_l0"].shape[1]
    wih_t = params["weight_ih_l0"].T
    whh_t = params["weight_hh_l0"].T
    bias = params["bias_ih_l0"] + params["bias_hh_l0"]
    h = jnp.zeros((B, H), jnp.float32)
    c = jnp.zeros((B, H), jnp.float32)
    for t in range(T):
        z = x[:, t, :] @ wih_t + h @ whh_t + bias
        i = jax.nn.sigmoid(z[:, 0 * H:1 * H])
        f = jax.nn.sigmoid(z[:, 1 * H:2 * H])
        g = jnp.tanh(z[:, 2 * H:3 * H])
        o = jax.nn.sigmoid(z[:, 3 * H:4 * H])
        c = f * c + i * g
        h = o * jnp.tanh(c)
    mu = jnp.mean(h, axis=-1, keepdims=True)
    var = jnp.mean((h - mu) ** 2, axis=-1, keepdims=True)
    y = (h - mu) / jnp.sqrt(var + 1e-5)
    y = y * params["ln_weight"] + params["ln_bias"]
    mean = y @ params["fc_mean_w"].T + params["fc_mean_b"]
    log_std = y @ params["fc_log_std_w"].T + params["fc_log_std_b"]
    return mean[:, 0], log_std[:, 0]


def _init_params(key, input_size, hidden_size):
    ks = jax.random.split(key, 10)
    H, D = hidden_size, input_size
    s = 0.1
    return {
        "weight_ih_l0": s * jax.random.normal(ks[0], (4 * H, D), jnp.float32),
        "weight_hh_l0": s * jax.random.normal(ks[1], (4 * H, H), jnp.float32),
        "bias_ih_l0": s * jax.random.normal(ks[2], (4 * H,), jnp.float32),
        "bias_hh_l0": s * jax.random.normal(ks[3], (4 * H,), jnp.float32),
        "ln_weight": jnp.ones((H,), jnp.float32) + s * jax.random.normal(ks[4], (H,), jnp.float32),
        "ln_bias": s * jax.random.normal(ks[5], (H,), jnp.float32),
        "fc_mean_w": s * jax.random.normal(ks[6], (1, H), jnp.float32),
        "fc_mean_b": s * jax.random.normal(ks[7], (1,), jnp.float32),
        "fc_log_std_w": s * jax.random.normal(ks[8], (1, H), jnp.float32),
        "fc_log_std_b": s * jax.random.normal(ks[9], (1,), jnp.float32),
    }


if __name__ == "__main__":
    B, T, D, H = 2, 8, 4, 32   # batch=2, seq=8, input_size=4, hidden_size=32

    key = jax.random.PRNGKey(0)
    k_x, k_p = jax.random.split(key)
    x = jax.random.normal(k_x, (B, T, D), jnp.float32)
    params = _init_params(k_p, D, H)

    mean, log_std = prediction_network_forward(x, params)
    jax.block_until_ready((mean, log_std))

    mean_ref, log_std_ref = _reference_forward(x, params)
    assert mean.shape == (B,) and log_std.shape == (B,)
    assert jnp.allclose(mean, mean_ref, atol=1e-4, rtol=1e-4)
    assert jnp.allclose(log_std, log_std_ref, atol=1e-4, rtol=1e-4)

    print("KERNEL_OK")
</pallas_src>

<mosaic_0001>
module attributes {stable_mosaic.version = 11 : i64} {
  func.func @_prediction_kernel(%arg0: memref<16x4xf32, #tpu.memory_space<vmem>>, %arg1: memref<4x128xf32, #tpu.memory_space<vmem>>, %arg2: memref<32x128xf32, #tpu.memory_space<vmem>>, %arg3: memref<1x128xf32, #tpu.memory_space<vmem>>, %arg4: memref<1x32xf32, #tpu.memory_space<vmem>>, %arg5: memref<1x32xf32, #tpu.memory_space<vmem>>, %arg6: memref<32x2xf32, #tpu.memory_space<vmem>>, %arg7: memref<1x2xf32, #tpu.memory_space<vmem>>, %arg8: memref<2x2xf32, #tpu.memory_space<vmem>>) attributes {dimension_semantics = [], scalar_prefetch = 0 : i64, scratch_operands = 0 : i64, tpu.core_type = #tpu.core_type<tc>} {
    %c0 = arith.constant 0 : index
    %c0_0 = arith.constant 0 : index
    %0 = vector.load %arg0[%c0, %c0_0] : memref<16x4xf32, #tpu.memory_space<vmem>>, vector<16x4xf32>
    %c0_1 = arith.constant 0 : index
    %c0_2 = arith.constant 0 : index
    %1 = vector.load %arg1[%c0_1, %c0_2] : memref<4x128xf32, #tpu.memory_space<vmem>>, vector<4x128xf32>
    %cst = arith.constant dense<0.000000e+00> : vector<16x128xf32>
    %2 = tpu.matmul %0, %1, %cst {dimension_numbers = #tpu.dot_dimension_numbers<[1], [0], [0], [1], [0, 0, 1, 1], [], []>} : vector<16x4xf32>, vector<4x128xf32>, vector<16x128xf32> -> vector<16x128xf32>
    %c0_3 = arith.constant 0 : index
    %c0_4 = arith.constant 0 : index
    %3 = vector.load %arg3[%c0_3, %c0_4] : memref<1x128xf32, #tpu.memory_space<vmem>>, vector<1x128xf32>
    %4 = vector.broadcast %3 : vector<1x128xf32> to vector<16x128xf32>
    %5 = arith.addf %2, %4 : vector<16x128xf32>
    %c0_5 = arith.constant 0 : index
    %c0_6 = arith.constant 0 : index
    %6 = vector.load %arg2[%c0_5, %c0_6] : memref<32x128xf32, #tpu.memory_space<vmem>>, vector<32x128xf32>
    %cst_7 = arith.constant 0.000000e+00 : f32
    %7 = vector.broadcast %cst_7 : f32 to vector<2x32xf32>
    %cst_8 = arith.constant 0.000000e+00 : f32
    %8 = vector.broadcast %cst_8 : f32 to vector<2x32xf32>
    %9 = vector.extract_strided_slice %5 {offsets = [0, 0], sizes = [2, 128], strides = [1, 1]} : vector<16x128xf32> to vector<2x128xf32>
    %cst_9 = arith.constant dense<0.000000e+00> : vector<2x128xf32>
    %10 = tpu.matmul %7, %6, %cst_9 {dimension_numbers = #tpu.dot_dimension_numbers<[1], [0], [0], [1], [0, 0, 1, 1], [], []>} : vector<2x32xf32>, vector<32x128xf32>, vector<2x128xf32> -> vector<2x128xf32>
    %11 = arith.addf %9, %10 : vector<2x128xf32>
    %12 = arith.negf %11 : vector<2x128xf32>
    %13 = math.exp %12 : vector<2x128xf32>
    %cst_10 = arith.constant 1.000000e+00 : f32
    %14 = vector.broadcast %cst_10 : f32 to vector<2x128xf32>
    %15 = arith.addf %14, %13 : vector<2x128xf32>
    %16 = arith.divf %14, %15 : vector<2x128xf32>
    %17 = vector.extract_strided_slice %16 {offsets = [0, 0], sizes = [2, 32], strides = [1, 1]} : vector<2x128xf32> to vector<2x32xf32>
    %18 = vector.extract_strided_slice %16 {offsets = [0, 32], sizes = [2, 32], strides = [1, 1]} : vector<2x128xf32> to vector<2x32xf32>
    %19 = vector.extract_strided_slice %16 {offsets = [0, 64], sizes = [2, 32], strides = [1, 1]} : vector<2x128xf32> to vector<2x32xf32>
    %20 = vector.extract_strided_slice %11 {offsets = [0, 96], sizes = [2, 32], strides = [1, 1]} : vector<2x128xf32> to vector<2x32xf32>
    %21 = math.tanh %20 : vector<2x32xf32>
    %22 = arith.mulf %18, %8 : vector<2x32xf32>
    %23 = arith.mulf %17, %21 : vector<2x32xf32>
    %24 = arith.addf %22, %23 : vector<2x32xf32>
    %25 = math.tanh %24 : vector<2x32xf32>
    %26 = arith.mulf %19, %25 : vector<2x32xf32>
    %27 = vector.extract_strided_slice %5 {offsets = [2, 0], sizes = [2, 128], strides = [1, 1]} : vector<16x128xf32> to vector<2x128xf32>
    %cst_11 = arith.constant dense<0.000000e+00> : vector<2x128xf32>
    %28 = tpu.matmul %26, %6, %cst_11 {dimension_numbers = #tpu.dot_dimension_numbers<[1], [0], [0], [1], [0, 0, 1, 1], [], []>} : vector<2x32xf32>, vector<32x128xf32>, vector<2x128xf32> -> vector<2x128xf32>
    %29 = arith.addf %27, %28 : vector<2x128xf32>
    %30 = arith.negf %29 : vector<2x128xf32>
    %31 = math.exp %30 : vector<2x128xf32>
    %cst_12 = arith.constant 1.000000e+00 : f32
    %32 = vector.broadcast %cst_12 : f32 to vector<2x128xf32>
    %33 = arith.addf %32, %31 : vector<2x128xf32>
    %34 = arith.divf %32, %33 : vector<2x128xf32>
    %35 = vector.extract_strided_slice %34 {offsets = [0, 0], sizes = [2, 32], strides = [1, 1]} : vector<2x128xf32> to vector<2x32xf32>
    %36 = vector.extract_strided_slice %34 {offsets = [0, 32], sizes = [2, 32], strides = [1, 1]} : vector<2x128xf32> to vector<2x32xf32>
    %37 = vector.extract_strided_slice %34 {offsets = [0, 64], sizes = [2, 32], strides = [1, 1]} : vector<2x128xf32> to vector<2x32xf32>
    %38 = vector.extract_strided_slice %29 {offsets = [0, 96], sizes = [2, 32], strides = [1, 1]} : vector<2x128xf32> to vector<2x32xf32>
    %39 = math.tanh %38 : vector<2x32xf32>
    %40 = arith.mulf %36, %24 : vector<2x32xf32>
    %41 = arith.mulf %35, %39 : vector<2x32xf32>
    %42 = arith.addf %40, %41 : vector<2x32xf32>
    %43 = math.tanh %42 : vector<2x32xf32>
    %44 = arith.mulf %37, %43 : vector<2x32xf32>
    %45 = vector.extract_strided_slice %5 {offsets = [4, 0], sizes = [2, 128], strides = [1, 1]} : vector<16x128xf32> to vector<2x128xf32>
    %cst_13 = arith.constant dense<0.000000e+00> : vector<2x128xf32>
    %46 = tpu.matmul %44, %6, %cst_13 {dimension_numbers = #tpu.dot_dimension_numbers<[1], [0], [0], [1], [0, 0, 1, 1], [], []>} : vector<2x32xf32>, vector<32x128xf32>, vector<2x128xf32> -> vector<2x128xf32>
    %47 = arith.addf %45, %46 : vector<2x128xf32>
    %48 = arith.negf %47 : vector<2x128xf32>
    %49 = math.exp %48 : vector<2x128xf32>
    %cst_14 = arith.constant 1.000000e+00 : f32
    %50 = vector.broadcast %cst_14 : f32 to vector<2x128xf32>
    %51 = arith.addf %50, %49 : vector<2x128xf32>
    %52 = arith.divf %50, %51 : vector<2x128xf32>
    %53 = vector.extract_strided_slice %52 {offsets = [0, 0], sizes = [2, 32], strides = [1, 1]} : vector<2x128xf32> to vector<2x32xf32>
    %54 = vector.extract_strided_slice %52 {offsets = [0, 32], sizes = [2, 32], strides = [1, 1]} : vector<2x128xf32> to vector<2x32xf32>
    %55 = vector.extract_strided_slice %52 {offsets = [0, 64], sizes = [2, 32], strides = [1, 1]} : vector<2x128xf32> to vector<2x32xf32>
    %56 = vector.extract_strided_slice %47 {offsets = [0, 96], sizes = [2, 32], strides = [1, 1]} : vector<2x128xf32> to vector<2x32xf32>
    %57 = math.tanh %56 : vector<2x32xf32>
    %58 = arith.mulf %54, %42 : vector<2x32xf32>
    %59 = arith.mulf %53, %57 : vector<2x32xf32>
    %60 = arith.addf %58, %59 : vector<2x32xf32>
    %61 = math.tanh %60 : vector<2x32xf32>
    %62 = arith.mulf %55, %61 : vector<2x32xf32>
    %63 = vector.extract_strided_slice %5 {offsets = [6, 0], sizes = [2, 128], strides = [1, 1]} : vector<16x128xf32> to vector<2x128xf32>
    %cst_15 = arith.constant dense<0.000000e+00> : vector<2x128xf32>
    %64 = tpu.matmul %62, %6, %cst_15 {dimension_numbers = #tpu.dot_dimension_numbers<[1], [0], [0], [1], [0, 0, 1, 1], [], []>} : vector<2x32xf32>, vector<32x128xf32>, vector<2x128xf32> -> vector<2x128xf32>
    %65 = arith.addf %63, %64 : vector<2x128xf32>
    %66 = arith.negf %65 : vector<2x128xf32>
    %67 = math.exp %66 : vector<2x128xf32>
    %cst_16 = arith.constant 1.000000e+00 : f32
    %68 = vector.broadcast %cst_16 : f32 to vector<2x128xf32>
    %69 = arith.addf %68, %67 : vector<2x128xf32>
    %70 = arith.divf %68, %69 : vector<2x128xf32>
    %71 = vector.extract_strided_slice %70 {offsets = [0, 0], sizes = [2, 32], strides = [1, 1]} : vector<2x128xf32> to vector<2x32xf32>
    %72 = vector.extract_strided_slice %70 {offsets = [0, 32], sizes = [2, 32], strides = [1, 1]} : vector<2x128xf32> to vector<2x32xf32>
    %73 = vector.extract_strided_slice %70 {offsets = [0, 64], sizes = [2, 32], strides = [1, 1]} : vector<2x128xf32> to vector<2x32xf32>
    %74 = vector.extract_strided_slice %65 {offsets = [0, 96], sizes = [2, 32], strides = [1, 1]} : vector<2x128xf32> to vector<2x32xf32>
    %75 = math.tanh %74 : vector<2x32xf32>
    %76 = arith.mulf %72, %60 : vector<2x32xf32>
    %77 = arith.mulf %71, %75 : vector<2x32xf32>
    %78 = arith.addf %76, %77 : vector<2x32xf32>
    %79 = math.tanh %78 : vector<2x32xf32>
    %80 = arith.mulf %73, %79 : vector<2x32xf32>
    %81 = vector.extract_strided_slice %5 {offsets = [8, 0], sizes = [2, 128], strides = [1, 1]} : vector<16x128xf32> to vector<2x128xf32>
    %cst_17 = arith.constant dense<0.000000e+00> : vector<2x128xf32>
    %82 = tpu.matmul %80, %6, %cst_17 {dimension_numbers = #tpu.dot_dimension_numbers<[1], [0], [0], [1], [0, 0, 1, 1], [], []>} : vector<2x32xf32>, vector<32x128xf32>, vector<2x128xf32> -> vector<2x128xf32>
    %83 = arith.addf %81, %82 : vector<2x128xf32>
    %84 = arith.negf %83 : vector<2x128xf32>
    %85 = math.exp %84 : vector<2x128xf32>
    %cst_18 = arith.constant 1.000000e+00 : f32
    %86 = vector.broadcast %cst_18 : f32 to vector<2x128xf32>
    %87 = arith.addf %86, %85 : vector<2x128xf32>
    %88 = arith.divf %86, %87 : vector<2x128xf32>
    %89 = vector.extract_strided_slice %88 {offsets = [0, 0], sizes = [2, 32], strides = [1, 1]} : vector<2x128xf32> to vector<2x32xf32>
    %90 = vector.extract_strided_slice %88 {offsets = [0, 32], sizes = [2, 32], strides = [1, 1]} : vector<2x128xf32> to vector<2x32xf32>
    %91 = vector.extract_strided_slice %88 {offsets = [0, 64], sizes = [2, 32], strides = [1, 1]} : vector<2x128xf32> to vector<2x32xf32>
    %92 = vector.extract_strided_slice %83 {offsets = [0, 96], sizes = [2, 32], strides = [1, 1]} : vector<2x128xf32> to vector<2x32xf32>
    %93 = math.tanh %92 : vector<2x32xf32>
    %94 = arith.mulf %90, %78 : vector<2x32xf32>
    %95 = arith.mulf %89, %93 : vector<2x32xf32>
    %96 = arith.addf %94, %95 : vector<2x32xf32>
    %97 = math.tanh %96 : vector<2x32xf32>
    %98 = arith.mulf %91, %97 : vector<2x32xf32>
    %99 = vector.extract_strided_slice %5 {offsets = [10, 0], sizes = [2, 128], strides = [1, 1]} : vector<16x128xf32> to vector<2x128xf32>
    %cst_19 = arith.constant dense<0.000000e+00> : vector<2x128xf32>
    %100 = tpu.matmul %98, %6, %cst_19 {dimension_numbers = #tpu.dot_dimension_numbers<[1], [0], [0], [1], [0, 0, 1, 1], [], []>} : vector<2x32xf32>, vector<32x128xf32>, vector<2x128xf32> -> vector<2x128xf32>
    %101 = arith.addf %99, %100 : vector<2x128xf32>
    %102 = arith.negf %101 : vector<2x128xf32>
    %103 = math.exp %102 : vector<2x128xf32>
    %cst_20 = arith.constant 1.000000e+00 : f32
    %104 = vector.broadcast %cst_20 : f32 to vector<2x128xf32>
    %105 = arith.addf %104, %103 : vector<2x128xf32>
    %106 = arith.divf %104, %105 : vector<2x128xf32>
    %107 = vector.extract_strided_slice %106 {offsets = [0, 0], sizes = [2, 32], strides = [1, 1]} : vector<2x128xf32> to vector<2x32xf32>
    %108 = vector.extract_strided_slice %106 {offsets = [0, 32], sizes = [2, 32], strides = [1, 1]} : vector<2x128xf32> to vector<2x32xf32>
    %109 = vector.extract_strided_slice %106 {offsets = [0, 64], sizes = [2, 32], strides = [1, 1]} : vector<2x128xf32> to vector<2x32xf32>
    %110 = vector.extract_strided_slice %101 {offsets = [0, 96], sizes = [2, 32], strides = [1, 1]} : vector<2x128xf32> to vector<2x32xf32>
    %111 = math.tanh %110 : vector<2x32xf32>
    %112 = arith.mulf %108, %96 : vector<2x32xf32>
    %113 = arith.mulf %107, %111 : vector<2x32xf32>
    %114 = arith.addf %112, %113 : vector<2x32xf32>
    %115 = math.tanh %114 : vector<2x32xf32>
    %116 = arith.mulf %109, %115 : vector<2x32xf32>
    %117 = vector.extract_strided_slice %5 {offsets = [12, 0], sizes = [2, 128], strides = [1, 1]} : vector<16x128xf32> to vector<2x128xf32>
    %cst_21 = arith.constant dense<0.000000e+00> : vector<2x128xf32>
    %118 = tpu.matmul %116, %6, %cst_21 {dimension_numbers = #tpu.dot_dimension_numbers<[1], [0], [0], [1], [0, 0, 1, 1], [], []>} : vector<2x32xf32>, vector<32x128xf32>, vector<2x128xf32> -> vector<2x128xf32>
    %119 = arith.addf %117, %118 : vector<2x128xf32>
    %120 = arith.negf %119 : vector<2x128xf32>
    %121 = math.exp %120 : vector<2x128xf32>
    %cst_22 = arith.constant 1.000000e+00 : f32
    %122 = vector.broadcast %cst_22 : f32 to vector<2x128xf32>
    %123 = arith.addf %122, %121 : vector<2x128xf32>
    %124 = arith.divf %122, %123 : vector<2x128xf32>
    %125 = vector.extract_strided_slice %124 {offsets = [0, 0], sizes = [2, 32], strides = [1, 1]} : vector<2x128xf32> to vector<2x32xf32>
    %126 = vector.extract_strided_slice %124 {offsets = [0, 32], sizes = [2, 32], strides = [1, 1]} : vector<2x128xf32> to vector<2x32xf32>
    %127 = vector.extract_strided_slice %124 {offsets = [0, 64], sizes = [2, 32], strides = [1, 1]} : vector<2x128xf32> to vector<2x32xf32>
    %128 = vector.extract_strided_slice %119 {offsets = [0, 96], sizes = [2, 32], strides = [1, 1]} : vector<2x128xf32> to vector<2x32xf32>
    %129 = math.tanh %128 : vector<2x32xf32>
    %130 = arith.mulf %126, %114 : vector<2x32xf32>
    %131 = arith.mulf %125, %129 : vector<2x32xf32>
    %132 = arith.addf %130, %131 : vector<2x32xf32>
    %133 = math.tanh %132 : vector<2x32xf32>
    %134 = arith.mulf %127, %133 : vector<2x32xf32>
    %135 = vector.extract_strided_slice %5 {offsets = [14, 0], sizes = [2, 128], strides = [1, 1]} : vector<16x128xf32> to vector<2x128xf32>
    %cst_23 = arith.constant dense<0.000000e+00> : vector<2x128xf32>
    %136 = tpu.matmul %134, %6, %cst_23 {dimension_numbers = #tpu.dot_dimension_numbers<[1], [0], [0], [1], [0, 0, 1, 1], [], []>} : vector<2x32xf32>, vector<32x128xf32>, vector<2x128xf32> -> vector<2x128xf32>
    %137 = arith.addf %135, %136 : vector<2x128xf32>
    %138 = arith.negf %137 : vector<2x128xf32>
    %139 = math.exp %138 : vector<2x128xf32>
    %cst_24 = arith.constant 1.000000e+00 : f32
    %140 = vector.broadcast %cst_24 : f32 to vector<2x128xf32>
    %141 = arith.addf %140, %139 : vector<2x128xf32>
    %142 = arith.divf %140, %141 : vector<2x128xf32>
    %143 = vector.extract_strided_slice %142 {offsets = [0, 0], sizes = [2, 32], strides = [1, 1]} : vector<2x128xf32> to vector<2x32xf32>
    %144 = vector.extract_strided_slice %142 {offsets = [0, 32], sizes = [2, 32], strides = [1, 1]} : vector<2x128xf32> to vector<2x32xf32>
    %145 = vector.extract_strided_slice %142 {offsets = [0, 64], sizes = [2, 32], strides = [1, 1]} : vector<2x128xf32> to vector<2x32xf32>
    %146 = vector.extract_strided_slice %137 {offsets = [0, 96], sizes = [2, 32], strides = [1, 1]} : vector<2x128xf32> to vector<2x32xf32>
    %147 = math.tanh %146 : vector<2x32xf32>
    %148 = arith.mulf %144, %132 : vector<2x32xf32>
    %149 = arith.mulf %143, %147 : vector<2x32xf32>
    %150 = arith.addf %148, %149 : vector<2x32xf32>
    %151 = math.tanh %150 : vector<2x32xf32>
    %152 = arith.mulf %145, %151 : vector<2x32xf32>
    %cst_25 = arith.constant dense<0.000000e+00> : vector<2xf32>
    %153 = vector.multi_reduction <add>, %152, %cst_25 [1] : vector<2x32xf32> to vector<2xf32>
    %154 = vector.shape_cast %153 : vector<2xf32> to vector<2x1xf32>
    %cst_26 = arith.constant 3.200000e+01 : f32
    %155 = vector.broadcast %cst_26 : f32 to vector<2x1xf32>
    %156 = arith.divf %154, %155 : vector<2x1xf32>
    %157 = vector.broadcast %156 : vector<2x1xf32> to vector<2x32xf32>
    %158 = arith.subf %152, %157 : vector<2x32xf32>
    %159 = arith.mulf %158, %158 : vector<2x32xf32>
    %cst_27 = arith.constant dense<0.000000e+00> : vector<2xf32>
    %160 = vector.multi_reduction <add>, %159, %cst_27 [1] : vector<2x32xf32> to vector<2xf32>
    %161 = vector.shape_cast %160 : vector<2xf32> to vector<2x1xf32>
    %cst_28 = arith.constant 3.200000e+01 : f32
    %162 = vector.broadcast %cst_28 : f32 to vector<2x1xf32>
    %163 = arith.divf %161, %162 : vector<2x1xf32>
    %164 = vector.broadcast %156 : vector<2x1xf32> to vector<2x32xf32>
    %165 = arith.subf %152, %164 : vector<2x32xf32>
    %cst_29 = arith.constant 9.99999974E-6 : f32
    %166 = vector.broadcast %cst_29 : f32 to vector<2x1xf32>
    %167 = arith.addf %163, %166 : vector<2x1xf32>
    %168 = math.rsqrt %167 : vector<2x1xf32>
    %169 = vector.broadcast %168 : vector<2x1xf32> to vector<2x32xf32>
    %170 = arith.mulf %165, %169 : vector<2x32xf32>
    %c0_30 = arith.constant 0 : index
    %c0_31 = arith.constant 0 : index
    %171 = vector.load %arg4[%c0_30, %c0_31] : memref<1x32xf32, #tpu.memory_space<vmem>>, vector<1x32xf32>
    %172 = vector.broadcast %171 : vector<1x32xf32> to vector<2x32xf32>
    %173 = arith.mulf %170, %172 : vector<2x32xf32>
    %c0_32 = arith.constant 0 : index
    %c0_33 = arith.constant 0 : index
    %174 = vector.load %arg5[%c0_32, %c0_33] : memref<1x32xf32, #tpu.memory_space<vmem>>, vector<1x32xf32>
    %175 = vector.broadcast %174 : vector<1x32xf32> to vector<2x32xf32>
    %176 = arith.addf %173, %175 : vector<2x32xf32>
    %c0_34 = arith.constant 0 : index
    %c0_35 = arith.constant 0 : index
    %177 = vector.load %arg6[%c0_34, %c0_35] : memref<32x2xf32, #tpu.memory_space<vmem>>, vector<32x2xf32>
    %cst_36 = arith.constant dense<0.000000e+00> : vector<2x2xf32>
    %178 = tpu.matmul %176, %177, %cst_36 {dimension_numbers = #tpu.dot_dimension_numbers<[1], [0], [0], [1], [0, 0, 1, 1], [], []>} : vector<2x32xf32>, vector<32x2xf32>, vector<2x2xf32> -> vector<2x2xf32>
    %c0_37 = arith.constant 0 : index
    %c0_38 = arith.constant 0 : index
    %179 = vector.load %arg7[%c0_37, %c0_38] : memref<1x2xf32, #tpu.memory_space<vmem>>, vector<1x2xf32>
    %180 = vector.broadcast %179 : vector<1x2xf32> to vector<2x2xf32>
    %181 = arith.addf %178, %180 : vector<2x2xf32>
    %c0_39 = arith.constant 0 : index
    %c0_40 = arith.constant 0 : index
    %182 = vector.load %arg8[%c0_39, %c0_40] : memref<2x2xf32, #tpu.memory_space<vmem>>, vector<2x2xf32>
    tpu.vector_store %arg8[%c0_39, %c0_40], %181 {strides = array<i32>} : memref<2x2xf32, #tpu.memory_space<vmem>>, vector<2x2xf32>,
    return
  }
}

</mosaic_0001>

<llo_original>
// kernel: prediction_network_forward.1
$region0: #{prediction_network_forward.1}
  #allocation0 [shape = 'u32[]', space=smem, size = 0x4, offset = 0x4, fixed_abs, tag = 'smem constant byte address 0x4 - core index']
  #allocation1 [shape = 'u32[144,128]{1,0:T(1,128)}', space=vmem, size = 0x12000, scoped, tag = 'internal scratch']
  %s0 = inlined_call_operand.vmem [shape: f32[16,4], index: 0, kind: input, shape index: {}]
  %s1 = inlined_call_operand.vmem [shape: f32[4,128], index: 1, kind: input, shape index: {}]
  %s2 = inlined_call_operand.vmem [shape: f32[32,128], index: 2, kind: input, shape index: {}]
  %s3 = inlined_call_operand.vmem [shape: f32[1,128], index: 3, kind: input, shape index: {}]
  %s4 = inlined_call_operand.vmem [shape: f32[1,32], index: 4, kind: input, shape index: {}]
  %s5 = inlined_call_operand.vmem [shape: f32[1,32], index: 5, kind: input, shape index: {}]
  %s6 = inlined_call_operand.vmem [shape: f32[32,2], index: 6, kind: input, shape index: {}]
  %s7 = inlined_call_operand.vmem [shape: f32[1,2], index: 7, kind: input, shape index: {}]
  %s8 = inlined_call_operand.vmem [shape: f32[2,2], index: 8, kind: output, shape index: {}]
  %s9 = sld [smem:[#allocation0]]
  $region42: #{prediction_network_forward.1} parent=0
    _
  %s11 = ssub.s32 1, %s9
  %s12 = scalar_select 0, %s11, %s9
  // Predicated region
  $region2: #{prediction_network_forward.1} parent=0 // pred_check
    _
  $region3: #{prediction_network_forward.1} parent=0 // pred_check_branch
    %14 = sbr.rel (0) target = $region5
  $region4: #{prediction_network_forward.1} parent=0 // pred_region
    _
  $region5: #{prediction_network_forward.1} parent=0 // pred_fallthru
    _
  // Predicated region
  $region6: #{prediction_network_forward.1} parent=0 // pred_check
    _
  $region7: #{prediction_network_forward.1} parent=0 // pred_check_branch
    %16 = sbr.rel (0) target = $region9
  $region8: #{prediction_network_forward.1} parent=0 // pred_region
    _
  $region9: #{prediction_network_forward.1} parent=0 // pred_fallthru
    _
  // Predicated region
  $region10: #{prediction_network_forward.1} parent=0 // pred_check
    _
  $region11: #{prediction_network_forward.1} parent=0 // pred_check_branch
    %18 = sbr.rel (0) target = $region13
  $region12: #{prediction_network_forward.1} parent=0 // pred_region
    _
  $region13: #{prediction_network_forward.1} parent=0 // pred_fallthru
    _
  // Predicated region
  $region14: #{prediction_network_forward.1} parent=0 // pred_check
    _
  $region15: #{prediction_network_forward.1} parent=0 // pred_check_branch
    %20 = sbr.rel (0) target = $region17
  $region16: #{prediction_network_forward.1} parent=0 // pred_region
    _
  $region17: #{prediction_network_forward.1} parent=0 // pred_fallthru
    _
  // Predicated region
  $region18: #{prediction_network_forward.1} parent=0 // pred_check
    _
  $region19: #{prediction_network_forward.1} parent=0 // pred_check_branch
    %22 = sbr.rel (0) target = $region21
  $region20: #{prediction_network_forward.1} parent=0 // pred_region
    _
  $region21: #{prediction_network_forward.1} parent=0 // pred_fallthru
    _
  // Predicated region
  $region22: #{prediction_network_forward.1} parent=0 // pred_check
    _
  $region23: #{prediction_network_forward.1} parent=0 // pred_check_branch
    %24 = sbr.rel (0) target = $region25
  $region24: #{prediction_network_forward.1} parent=0 // pred_region
    _
  $region25: #{prediction_network_forward.1} parent=0 // pred_fallthru
    _
  // Predicated region
  $region26: #{prediction_network_forward.1} parent=0 // pred_check
    _
  $region27: #{prediction_network_forward.1} parent=0 // pred_check_branch
    %26 = sbr.rel (0) target = $region29
  $region28: #{prediction_network_forward.1} parent=0 // pred_region
    _
  $region29: #{prediction_network_forward.1} parent=0 // pred_fallthru
    _
  // Predicated region
  $region30: #{prediction_network_forward.1} parent=0 // pred_check
    _
  $region31: #{prediction_network_forward.1} parent=0 // pred_check_branch
    %28 = sbr.rel (0) target = $region33
  $region32: #{prediction_network_forward.1} parent=0 // pred_region
    _
  $region33: #{prediction_network_forward.1} parent=0 // pred_fallthru
    _
  %v29 = vld [vmem:[%s0] sm:$0xff]
  %v30 = vld [vmem:[%s0 + $0x8] sm:$0xff]
  %v31 = vld [vmem:[%s1] sm:$0xf]
  %v32 = vld [vmem:[%s3] sm:$0x1]
  %v34 = vlaneseq
  %v35 = vshrl.u32 %v34, 7
  %v36 = vsub.s32 0, %v35
  %v37 = vrot.slane %v32, %v36
  %vm39 = vcmask 31744
  %v41 = vsel %vm39, %v29, 0
  %v44 = vsel %vm39, %v30, 0
  %vm46 = vcmask 1043456
  %v48 = vsel %vm46, %v31, 0
  %50 = vmatprep.subr.mxu0 0.0
  %51 = vmatpush1.msra.mxu0 0.0
  %52 = vmatprep.subr.mxu0 0.0
  %53 = vmatpush1.msra.mxu0 0.0
  %54 = vmatprep.subr.mxu0 0.0
  %55 = vmatpush1.msra.mxu0 0.0
  %56 = vmatprep.subr.mxu0 0.0
  %57 = vmatpush1.msra.mxu0 0.0
  %58 = vmatprep.subr.mxu0 0.0
  %59 = vmatpush1.msra.mxu0 0.0
  %60 = vmatprep.subr.mxu0 0.0
  %61 = vmatpush1.msra.mxu0 0.0
  %62 = vmatprep.subr.mxu0 0.0
  %63 = vmatpush1.msra.mxu0 0.0
  %64 = vmatprep.subr.mxu0 0.0
  %65 = vmatpush1.msra.mxu0 0.0
  %66 = vmatprep.subr.mxu0 0.0
  %67 = vmatpush1.msra.mxu0 0.0
  %68 = vmatprep.subr.mxu0 0.0
  %69 = vmatpush1.msra.mxu0 0.0
  %70 = vmatprep.subr.mxu0 0.0
  %71 = vmatpush1.msra.mxu0 0.0
  %72 = vmatprep.subr.mxu0 0.0
  %73 = vmatpush1.msra.mxu0 0.0
  %74 = vmatprep.subr.mxu0 0.0
  %75 = vmatpush1.msra.mxu0 0.0
  %76 = vmatprep.subr.mxu0 0.0
  %77 = vmatpush1.msra.mxu0 0.0
  %78 = vmatprep.subr.mxu0 0.0
  %79 = vmatpush1.msra.mxu0 0.0
  %80 = vmatprep.subr.mxu0 0.0
  %81 = vmatpush1.msra.mxu0 %v48
  %82 = vmatprep.subr.mxu0 0.0
  %83 = vmatpush2.msra.mxu0 0.0
  %84 = vmatprep.subr.mxu0 0.0
  %85 = vmatpush2.msra.mxu0 0.0
  %86 = vmatprep.subr.mxu0 0.0
  %87 = vmatpush2.msra.mxu0 0.0
  %88 = vmatprep.subr.mxu0 0.0
  %89 = vmatpush2.msra.mxu0 0.0
  %90 = vmatprep.subr.mxu0 0.0
  %91 = vmatpush2.msra.mxu0 0.0
  %92 = vmatprep.subr.mxu0 0.0
  %93 = vmatpush2.msra.mxu0 0.0
  %94 = vmatprep.subr.mxu0 0.0
  %95 = vmatpush2.msra.mxu0 0.0
  %96 = vmatprep.subr.mxu0 0.0
  %97 = vmatpush2.msra.mxu0 0.0
  %98 = vmatprep.subr.mxu0 0.0
  %99 = vmatpush2.msra.mxu0 0.0
  %100 = vmatprep.subr.mxu0 0.0
  %101 = vmatpush2.msra.mxu0 0.0
  %102 = vmatprep.subr.mxu0 0.0
  %103 = vmatpush2.msra.mxu0 0.0
  %104 = vmatprep.subr.mxu0 0.0
  %105 = vmatpush2.msra.mxu0 0.0
  %106 = vmatprep.subr.mxu0 0.0
  %107 = vmatpush2.msra.mxu0 0.0
  %108 = vmatprep.subr.mxu0 0.0
  %109 = vmatpush2.msra.mxu0 0.0
  %110 = vmatprep.subr.mxu0 0.0
  %111 = vmatpush2.msra.mxu0 0.0
  %112 = vmatprep.subr.mxu0 0.0
  %113 = vmatpush2.msra.mxu0 0.0
  %114 = vmatprep.mubr.f32.mxu0 0.0
  %115 = vmatmul.mubr.f32.gmra.mxu0 %v41
  %v116 = vpop.f32.mrf.mxu0
  %v117 = vadd.f32 %v37, %v116
  %v118 = vpop.f32.mrf.mxu0
  %119 = vmatprep.mubr.f32.mxu0 0.0
  %120 = vmatmul.mubr.f32.gmra.mxu0 %v44
  %v121 = vpop.f32.mrf.mxu0
  %v122 = vadd.f32 %v37, %v121
  %v123 = vpop.f32.mrf.mxu0
  %124 = vdwg.mxu0
  %v125 = vld [vmem:[%s2] sm:$0xff]
  %v126 = vld [vmem:[%s2 + $0x8] sm:$0xff]
  %v127 = vld [vmem:[%s2 + $0x10] sm:$0xff]
  %v128 = vld [vmem:[%s2 + $0x18] sm:$0xff]
  %vm129 = vcmask 261120
  %v131 = vsel %vm129, 0.0, 0
  %133 = vmatprep.subr.mxu0 0.0
  %134 = vmatpush1.msra.mxu0 0.0
  %135 = vmatprep.subr.mxu0 0.0
  %136 = vmatpush1.msra.mxu0 0.0
  %137 = vmatprep.subr.mxu0 0.0
  %138 = vmatpush1.msra.mxu0 0.0
  %139 = vmatprep.subr.mxu0 0.0
  %140 = vmatpush1.msra.mxu0 0.0
  %141 = vmatprep.subr.mxu0 0.0
  %142 = vmatpush1.msra.mxu0 0.0
  %143 = vmatprep.subr.mxu0 0.0
  %144 = vmatpush1.msra.mxu0 0.0
  %145 = vmatprep.subr.mxu0 0.0
  %146 = vmatpush1.msra.mxu0 0.0
  %147 = vmatprep.subr.mxu0 0.0
  %148 = vmatpush1.msra.mxu0 0.0
  %149 = vmatprep.subr.mxu0 0.0
  %150 = vmatpush1.msra.mxu0 0.0
  %151 = vmatprep.subr.mxu0 0.0
  %152 = vmatpush1.msra.mxu0 0.0
  %153 = vmatprep.subr.mxu0 0.0
  %154 = vmatpush1.msra.mxu0 0.0
  %155 = vmatprep.subr.mxu0 0.0
  %156 = vmatpush1.msra.mxu0 0.0
  %157 = vmatprep.subr.mxu0 0.0
  %158 = vmatpush1.msra.mxu0 %v128
  %159 = vmatprep.subr.mxu0 0.0
  %160 = vmatpush1.msra.mxu0 %v127
  %161 = vmatprep.subr.mxu0 0.0
  %162 = vmatpush1.msra.mxu0 %v126
  %163 = vmatprep.subr.mxu0 0.0
  %164 = vmatpush1.msra.mxu0 %v125
  %165 = vmatprep.subr.mxu0 0.0
  %166 = vmatpush2.msra.mxu0 0.0
  %167 = vmatprep.subr.mxu0 0.0
  %168 = vmatpush2.msra.mxu0 0.0
  %169 = vmatprep.subr.mxu0 0.0
  %170 = vmatpush2.msra.mxu0 0.0
  %171 = vmatprep.subr.mxu0 0.0
  %172 = vmatpush2.msra.mxu0 0.0
  %173 = vmatprep.subr.mxu0 0.0
  %174 = vmatpush2.msra.mxu0 0.0
  %175 = vmatprep.subr.mxu0 0.0
  %176 = vmatpush2.msra.mxu0 0.0
  %177 = vmatprep.subr.mxu0 0.0
  %178 = vmatpush2.msra.mxu0 0.0
  %179 = vmatprep.subr.mxu0 0.0
  %180 = vmatpush2.msra.mxu0 0.0
  %181 = vmatprep.subr.mxu0 0.0
  %182 = vmatpush2.msra.mxu0 0.0
  %183 = vmatprep.subr.mxu0 0.0
  %184 = vmatpush2.msra.mxu0 0.0
  %185 = vmatprep.subr.mxu0 0.0
  %186 = vmatpush2.msra.mxu0 0.0
  %187 = vmatprep.subr.mxu0 0.0
  %188 = vmatpush2.msra.mxu0 0.0
  %189 = vmatprep.subr.mxu0 0.0
  %190 = vmatpush2.msra.mxu0 0.0
  %191 = vmatprep.subr.mxu0 0.0
  %192 = vmatpush2.msra.mxu0 0.0
  %193 = vmatprep.subr.mxu0 0.0
  %194 = vmatpush2.msra.mxu0 0.0
  %195 = vmatprep.subr.mxu0 0.0
  %196 = vmatpush2.msra.mxu0 0.0
  %197 = vmatprep.mubr.f32.mxu0 0.0
  %198 = vmatmul.mubr.f32.gmra.mxu0 %v131
  %v199 = vpop.f32.mrf.mxu0
  %v200 = vadd.f32 0.0, %v199
  %v201 = vpop.f32.mrf.mxu0
  %202 = vdwg.mxu0
  %v203 = vadd.f32 %v117, %v200
  %v204 = vxor.u32 %v203, 2147483648
  %v205 = vmul.f32 %v204, 1.442695
  %v206 = vpow.pop %v205
  %v207 = vadd.f32 %v206, 1.0
  %v208 = vrcp.pop %v207
  %v209 = vmul.f32 1.0, %v208
  %v210 = vtanh.pop %v203
  %v211 = vmul.f32 %v209, 0.0
  %213 = vrot.lane.b32.xlu0 %v210, 32
  %v214 = vpop.permute.xlu0 %213
  %v216 = vmul.f32 %v209, %v214
  %218 = vrot.lane.b32.xlu0 %v216, 32
  %v219 = vpop.permute.xlu0 %218
  %v221 = vadd.f32 %v211, %v219
  %v222 = vtanh.pop %v221
  %224 = vrot.lane.b32.xlu0 %v222, 32
  %v225 = vpop.permute.xlu0 %224
  %v227 = vmul.f32 %v209, %v225
  %229 = vrot.lane.b32.xlu0 %v227, 64
  %v230 = vpop.permute.xlu0 %229
  %v231 = vsel %vm129, %v230, 0
  %233 = vmatprep.subr.mxu0 0.0
  %234 = vmatpush1.msra.mxu0 0.0
  %235 = vmatprep.subr.mxu0 0.0
  %236 = vmatpush1.msra.mxu0 0.0
  %237 = vmatprep.subr.mxu0 0.0
  %238 = vmatpush1.msra.mxu0 0.0
  %239 = vmatprep.subr.mxu0 0.0
  %240 = vmatpush1.msra.mxu0 0.0
  %241 = vmatprep.subr.mxu0 0.0
  %242 = vmatpush1.msra.mxu0 0.0
  %243 = vmatprep.subr.mxu0 0.0
  %244 = vmatpush1.msra.mxu0 0.0
  %245 = vmatprep.subr.mxu0 0.0
  %246 = vmatpush1.msra.mxu0 0.0
  %247 = vmatprep.subr.mxu0 0.0
  %248 = vmatpush1.msra.mxu0 0.0
  %249 = vmatprep.subr.mxu0 0.0
  %250 = vmatpush1.msra.mxu0 0.0
  %251 = vmatprep.subr.mxu0 0.0
  %252 = vmatpush1.msra.mxu0 0.0
  %253 = vmatprep.subr.mxu0 0.0
  %254 = vmatpush1.msra.mxu0 0.0
  %255 = vmatprep.subr.mxu0 0.0
  %256 = vmatpush1.msra.mxu0 0.0
  %257 = vmatprep.subr.mxu0 0.0
  %258 = vmatpush1.msra.mxu0 %v128
  %259 = vmatprep.subr.mxu0 0.0
  %260 = vmatpush1.msra.mxu0 %v127
  %261 = vmatprep.subr.mxu0 0.0
  %262 = vmatpush1.msra.mxu0 %v126
  %263 = vmatprep.subr.mxu0 0.0
  %264 = vmatpush1.msra.mxu0 %v125
  %265 = vmatprep.subr.mxu0 0.0
  %266 = vmatpush2.msra.mxu0 0.0
  %267 = vmatprep.subr.mxu0 0.0
  %268 = vmatpush2.msra.mxu0 0.0
  %269 = vmatprep.subr.mxu0 0.0
  %270 = vmatpush2.msra.mxu0 0.0
  %271 = vmatprep.subr.mxu0 0.0
  %272 = vmatpush2.msra.mxu0 0.0
  %273 = vmatprep.subr.mxu0 0.0
  %274 = vmatpush2.msra.mxu0 0.0
  %275 = vmatprep.subr.mxu0 0.0
  %276 = vmatpush2.msra.mxu0 0.0
  %277 = vmatprep.subr.mxu0 0.0
  %278 = vmatpush2.msra.mxu0 0.0
  %279 = vmatprep.subr.mxu0 0.0
  %280 = vmatpush2.msra.mxu0 0.0
  %281 = vmatprep.subr.mxu0 0.0
  %282 = vmatpush2.msra.mxu0 0.0
  %283 = vmatprep.subr.mxu0 0.0
  %284 = vmatpush2.msra.mxu0 0.0
  %285 = vmatprep.subr.mxu0 0.0
  %286 = vmatpush2.msra.mxu0 0.0
  %287 = vmatprep.subr.mxu0 0.0
  %288 = vmatpush2.msra.mxu0 0.0
  %289 = vmatprep.subr.mxu0 0.0
  %290 = vmatpush2.msra.mxu0 0.0
  %291 = vmatprep.subr.mxu0 0.0
  %292 = vmatpush2.msra.mxu0 0.0
  %293 = vmatprep.subr.mxu0 0.0
  %294 = vmatpush2.msra.mxu0 0.0
  %295 = vmatprep.subr.mxu0 0.0
  %296 = vmatpush2.msra.mxu0 0.0
  %297 = vmatprep.mubr.f32.mxu0 0.0
  %298 = vmatmul.mubr.f32.gmra.mxu0 %v231
  %v299 = vpop.f32.mrf.mxu0
  %v300 = vadd.f32 0.0, %v299
  %v301 = vpop.f32.mrf.mxu0
  %302 = vdwg.mxu0
  %v304 = vrot.slane %v300, 6
  %v306 = vadd.f32 %v117, %v304
  %v307 = vxor.u32 %v306, 2147483648
  %v308 = vmul.f32 %v307, 1.442695
  %v309 = vpow.pop %v308
  %v310 = vadd.f32 %v309, 1.0
  %v311 = vrcp.pop %v310
  %v312 = vmul.f32 1.0, %v311
  %v313 = vtanh.pop %v306
  %v315 = vrot.slane %v221, 6
  %v317 = vmul.f32 %v312, %v315
  %319 = vrot.lane.b32.xlu0 %v313, 32
  %v320 = vpop.permute.xlu0 %319
  %v322 = vmul.f32 %v312, %v320
  %324 = vrot.lane.b32.xlu0 %v322, 32
  %v325 = vpop.permute.xlu0 %324
  %v327 = vadd.f32 %v317, %v325
  %v328 = vtanh.pop %v327
  %330 = vrot.lane.b32.xlu0 %v328, 32
  %v331 = vpop.permute.xlu0 %330
  %v333 = vmul.f32 %v312, %v331
  %v335 = vrot.slane %v333, 2
  %336 = vrot.lane.b32.xlu0 %v335, 64
  %v337 = vpop.permute.xlu0 %336
  %v338 = vsel %vm129, %v337, 0
  %340 = vmatprep.subr.mxu0 0.0
  %341 = vmatpush1.msra.mxu0 0.0
  %342 = vmatprep.subr.mxu0 0.0
  %343 = vmatpush1.msra.mxu0 0.0
  %344 = vmatprep.subr.mxu0 0.0
  %345 = vmatpush1.msra.mxu0 0.0
  %346 = vmatprep.subr.mxu0 0.0
  %347 = vmatpush1.msra.mxu0 0.0
  %348 = vmatprep.subr.mxu0 0.0
  %349 = vmatpush1.msra.mxu0 0.0
  %350 = vmatprep.subr.mxu0 0.0
  %351 = vmatpush1.msra.mxu0 0.0
  %352 = vmatprep.subr.mxu0 0.0
  %353 = vmatpush1.msra.mxu0 0.0
  %354 = vmatprep.subr.mxu0 0.0
  %355 = vmatpush1.msra.mxu0 0.0
  %356 = vmatprep.subr.mxu0 0.0
  %357 = vmatpush1.msra.mxu0 0.0
  %358 = vmatprep.subr.mxu0 0.0
  %359 = vmatpush1.msra.mxu0 0.0
  %360 = vmatprep.subr.mxu0 0.0
  %361 = vmatpush1.msra.mxu0 0.0
  %362 = vmatprep.subr.mxu0 0.0
  %363 = vmatpush1.msra.mxu0 0.0
  %364 = vmatprep.subr.mxu0 0.0
  %365 = vmatpush1.msra.mxu0 %v128
  %366 = vmatprep.subr.mxu0 0.0
  %367 = vmatpush1.msra.mxu0 %v127
  %368 = vmatprep.subr.mxu0 0.0
  %369 = vmatpush1.msra.mxu0 %v126
  %370 = vmatprep.subr.mxu0 0.0
  %371 = vmatpush1.msra.mxu0 %v125
  %372 = vmatprep.subr.mxu0 0.0
  %373 = vmatpush2.msra.mxu0 0.0
  %374 = vmatprep.subr.mxu0 0.0
  %375 = vmatpush2.msra.mxu0 0.0
  %376 = vmatprep.subr.mxu0 0.0
  %377 = vmatpush2.msra.mxu0 0.0
  %378 = vmatprep.subr.mxu0 0.0
  %379 = vmatpush2.msra.mxu0 0.0
  %380 = vmatprep.subr.mxu0 0.0
  %381 = vmatpush2.msra.mxu0 0.0
  %382 = vmatprep.subr.mxu0 0.0
  %383 = vmatpush2.msra.mxu0 0.0
  %384 = vmatprep.subr.mxu0 0.0
  %385 = vmatpush2.msra.mxu0 0.0
  %386 = vmatprep.subr.mxu0 0.0
  %387 = vmatpush2.msra.mxu0 0.0
  %388 = vmatprep.subr.mxu0 0.0
  %389 = vmatpush2.msra.mxu0 0.0
  %390 = vmatprep.subr.mxu0 0.0
  %391 = vmatpush2.msra.mxu0 0.0
  %392 = vmatprep.subr.mxu0 0.0
  %393 = vmatpush2.msra.mxu0 0.0
  %394 = vmatprep.subr.mxu0 0.0
  %395 = vmatpush2.msra.mxu0 0.0
  %396 = vmatprep.subr.mxu0 0.0
  %397 = vmatpush2.msra.mxu0 0.0
  %398 = vmatprep.subr.mxu0 0.0
  %399 = vmatpush2.msra.mxu0 0.0
  %400 = vmatprep.subr.mxu0 0.0
  %401 = vmatpush2.msra.mxu0 0.0
  %402 = vmatprep.subr.mxu0 0.0
  %403 = vmatpush2.msra.mxu0 0.0
  %404 = vmatprep.mubr.f32.mxu0 0.0
  %405 = vmatmul.mubr.f32.gmra.mxu0 %v338
  %v406 = vpop.f32.mrf.mxu0
  %v407 = vadd.f32 0.0, %v406
  %v408 = vpop.f32.mrf.mxu0
  %409 = vdwg.mxu0
  %v411 = vrot.slane %v407, 4
  %v413 = vadd.f32 %v117, %v411
  %v414 = vxor.u32 %v413, 2147483648
  %v415 = vmul.f32 %v414, 1.442695
  %v416 = vpow.pop %v415
  %v417 = vadd.f32 %v416, 1.0
  %v418 = vrcp.pop %v417
  %v419 = vmul.f32 1.0, %v418
  %v420 = vtanh.pop %v413
  %v422 = vrot.slane %v327, 6
  %v424 = vmul.f32 %v419, %v422
  %426 = vrot.lane.b32.xlu0 %v420, 32
  %v427 = vpop.permute.xlu0 %426
  %v429 = vmul.f32 %v419, %v427
  %431 = vrot.lane.b32.xlu0 %v429, 32
  %v432 = vpop.permute.xlu0 %431
  %v434 = vadd.f32 %v424, %v432
  %v435 = vtanh.pop %v434
  %437 = vrot.lane.b32.xlu0 %v435, 32
  %v438 = vpop.permute.xlu0 %437
  %v440 = vmul.f32 %v419, %v438
  %v442 = vrot.slane %v440, 4
  %443 = vrot.lane.b32.xlu0 %v442, 64
  %v444 = vpop.permute.xlu0 %443
  %v445 = vsel %vm129, %v444, 0
  %447 = vmatprep.subr.mxu0 0.0
  %448 = vmatpush1.msra.mxu0 0.0
  %449 = vmatprep.subr.mxu0 0.0
  %450 = vmatpush1.msra.mxu0 0.0
  %451 = vmatprep.subr.mxu0 0.0
  %452 = vmatpush1.msra.mxu0 0.0
  %453 = vmatprep.subr.mxu0 0.0
  %454 = vmatpush1.msra.mxu0 0.0
  %455 = vmatprep.subr.mxu0 0.0
  %456 = vmatpush1.msra.mxu0 0.0
  %457 = vmatprep.subr.mxu0 0.0
  %458 = vmatpush1.msra.mxu0 0.0
  %459 = vmatprep.subr.mxu0 0.0
  %460 = vmatpush1.msra.mxu0 0.0
  %461 = vmatprep.subr.mxu0 0.0
  %462 = vmatpush1.msra.mxu0 0.0
  %463 = vmatprep.subr.mxu0 0.0
  %464 = vmatpush1.msra.mxu0 0.0
  %465 = vmatprep.subr.mxu0 0.0
  %466 = vmatpush1.msra.mxu0 0.0
  %467 = vmatprep.subr.mxu0 0.0
  %468 = vmatpush1.msra.mxu0 0.0
  %469 = vmatprep.subr.mxu0 0.0
  %470 = vmatpush1.msra.mxu0 0.0
  %471 = vmatprep.subr.mxu0 0.0
  %472 = vmatpush1.msra.mxu0 %v128
  %473 = vmatprep.subr.mxu0 0.0
  %474 = vmatpush1.msra.mxu0 %v127
  %475 = vmatprep.subr.mxu0 0.0
  %476 = vmatpush1.msra.mxu0 %v126
  %477 = vmatprep.subr.mxu0 0.0
  %478 = vmatpush1.msra.mxu0 %v125
  %479 = vmatprep.subr.mxu0 0.0
  %480 = vmatpush2.msra.mxu0 0.0
  %481 = vmatprep.subr.mxu0 0.0
  %482 = vmatpush2.msra.mxu0 0.0
  %483 = vmatprep.subr.mxu0 0.0
  %484 = vmatpush2.msra.mxu0 0.0
  %485 = vmatprep.subr.mxu0 0.0
  %486 = vmatpush2.msra.mxu0 0.0
  %487 = vmatprep.subr.mxu0 0.0
  %488 = vmatpush2.msra.mxu0 0.0
  %489 = vmatprep.subr.mxu0 0.0
  %490 = vmatpush2.msra.mxu0 0.0
  %491 = vmatprep.subr.mxu0 0.0
  %492 = vmatpush2.msra.mxu0 0.0
  %493 = vmatprep.subr.mxu0 0.0
  %494 = vmatpush2.msra.mxu0 0.0
  %495 = vmatprep.subr.mxu0 0.0
  %496 = vmatpush2.msra.mxu0 0.0
  %497 = vmatprep.subr.mxu0 0.0
  %498 = vmatpush2.msra.mxu0 0.0
  %499 = vmatprep.subr.mxu0 0.0
  %500 = vmatpush2.msra.mxu0 0.0
  %501 = vmatprep.subr.mxu0 0.0
  %502 = vmatpush2.msra.mxu0 0.0
  %503 = vmatprep.subr.mxu0 0.0
  %504 = vmatpush2.msra.mxu0 0.0
  %505 = vmatprep.subr.mxu0 0.0
  %506 = vmatpush2.msra.mxu0 0.0
  %507 = vmatprep.subr.mxu0 0.0
  %508 = vmatpush2.msra.mxu0 0.0
  %509 = vmatprep.subr.mxu0 0.0
  %510 = vmatpush2.msra.mxu0 0.0
  %511 = vmatprep.mubr.f32.mxu0 0.0
  %512 = vmatmul.mubr.f32.gmra.mxu0 %v445
  %v513 = vpop.f32.mrf.mxu0
  %v514 = vadd.f32 0.0, %v513
  %v515 = vpop.f32.mrf.mxu0
  %516 = vdwg.mxu0
  %v518 = vrot.slane %v514, 2
  %v520 = vadd.f32 %v117, %v518
  %v521 = vxor.u32 %v520, 2147483648
  %v522 = vmul.f32 %v521, 1.442695
  %v523 = vpow.pop %v522
  %v524 = vadd.f32 %v523, 1.0
  %v525 = vrcp.pop %v524
  %v526 = vmul.f32 1.0, %v525
  %v527 = vtanh.pop %v520
  %v529 = vrot.slane %v434, 6
  %v531 = vmul.f32 %v526, %v529
  %533 = vrot.lane.b32.xlu0 %v527, 32
  %v534 = vpop.permute.xlu0 %533
  %v536 = vmul.f32 %v526, %v534
  %538 = vrot.lane.b32.xlu0 %v536, 32
  %v539 = vpop.permute.xlu0 %538
  %v541 = vadd.f32 %v531, %v539
  %v542 = vtanh.pop %v541
  %544 = vrot.lane.b32.xlu0 %v542, 32
  %v545 = vpop.permute.xlu0 %544
  %v547 = vmul.f32 %v526, %v545
  %v549 = vrot.slane %v547, 6
  %550 = vrot.lane.b32.xlu0 %v549, 64
  %v551 = vpop.permute.xlu0 %550
  %v552 = vsel %vm129, %v551, 0
  %554 = vmatprep.subr.mxu0 0.0
  %555 = vmatpush1.msra.mxu0 0.0
  %556 = vmatprep.subr.mxu0 0.0
  %557 = vmatpush1.msra.mxu0 0.0
  %558 = vmatprep.subr.mxu0 0.0
  %559 = vmatpush1.msra.mxu0 0.0
  %560 = vmatprep.subr.mxu0 0.0
  %561 = vmatpush1.msra.mxu0 0.0
  %562 = vmatprep.subr.mxu0 0.0
  %563 = vmatpush1.msra.mxu0 0.0
  %564 = vmatprep.subr.mxu0 0.0
  %565 = vmatpush1.msra.mxu0 0.0
  %566 = vmatprep.subr.mxu0 0.0
  %567 = vmatpush1.msra.mxu0 0.0
  %568 = vmatprep.subr.mxu0 0.0
  %569 = vmatpush1.msra.mxu0 0.0
  %570 = vmatprep.subr.mxu0 0.0
  %571 = vmatpush1.msra.mxu0 0.0
  %572 = vmatprep.subr.mxu0 0.0
  %573 = vmatpush1.msra.mxu0 0.0
  %574 = vmatprep.subr.mxu0 0.0
  %575 = vmatpush1.msra.mxu0 0.0
  %576 = vmatprep.subr.mxu0 0.0
  %577 = vmatpush1.msra.mxu0 0.0
  %578 = vmatprep.subr.mxu0 0.0
  %579 = vmatpush1.msra.mxu0 %v128
  %580 = vmatprep.subr.mxu0 0.0
  %581 = vmatpush1.msra.mxu0 %v127
  %582 = vmatprep.subr.mxu0 0.0
  %583 = vmatpush1.msra.mxu0 %v126
  %584 = vmatprep.subr.mxu0 0.0
  %585 = vmatpush1.msra.mxu0 %v125
  %586 = vmatprep.subr.mxu0 0.0
  %587 = vmatpush2.msra.mxu0 0.0
  %588 = vmatprep.subr.mxu0 0.0
  %589 = vmatpush2.msra.mxu0 0.0
  %590 = vmatprep.subr.mxu0 0.0
  %591 = vmatpush2.msra.mxu0 0.0
  %592 = vmatprep.subr.mxu0 0.0
  %593 = vmatpush2.msra.mxu0 0.0
  %594 = vmatprep.subr.mxu0 0.0
  %595 = vmatpush2.msra.mxu0 0.0
  %596 = vmatprep.subr.mxu0 0.0
  %597 = vmatpush2.msra.mxu0 0.0
  %598 = vmatprep.subr.mxu0 0.0
  %599 = vmatpush2.msra.mxu0 0.0
  %600 = vmatprep.subr.mxu0 0.0
  %601 = vmatpush2.msra.mxu0 0.0
  %602 = vmatprep.subr.mxu0 0.0
  %603 = vmatpush2.msra.mxu0 0.0
  %604 = vmatprep.subr.mxu0 0.0
  %605 = vmatpush2.msra.mxu0 0.0
  %606 = vmatprep.subr.mxu0 0.0
  %607 = vmatpush2.msra.mxu0 0.0
  %608 = vmatprep.subr.mxu0 0.0
  %609 = vmatpush2.msra.mxu0 0.0
  %610 = vmatprep.subr.mxu0 0.0
  %611 = vmatpush2.msra.mxu0 0.0
  %612 = vmatprep.subr.mxu0 0.0
  %613 = vmatpush2.msra.mxu0 0.0
  %614 = vmatprep.subr.mxu0 0.0
  %615 = vmatpush2.msra.mxu0 0.0
  %616 = vmatprep.subr.mxu0 0.0
  %617 = vmatpush2.msra.mxu0 0.0
  %618 = vmatprep.mubr.f32.mxu0 0.0
  %619 = vmatmul.mubr.f32.gmra.mxu0 %v552
  %v620 = vpop.f32.mrf.mxu0
  %v621 = vadd.f32 0.0, %v620
  %v622 = vpop.f32.mrf.mxu0
  %623 = vdwg.mxu0
  %v624 = vadd.f32 %v122, %v621
  %v625 = vxor.u32 %v624, 2147483648
  %v626 = vmul.f32 %v625, 1.442695
  %v627 = vpow.pop %v626
  %v628 = vadd.f32 %v627, 1.0
  %v629 = vrcp.pop %v628
  %v630 = vmul.f32 1.0, %v629
  %v631 = vtanh.pop %v624
  %v633 = vrot.slane %v541, 6
  %v635 = vmul.f32 %v630, %v633
  %637 = vrot.lane.b32.xlu0 %v631, 32
  %v638 = vpop.permute.xlu0 %637
  %v640 = vmul.f32 %v630, %v638
  %642 = vrot.lane.b32.xlu0 %v640, 32
  %v643 = vpop.permute.xlu0 %642
  %v645 = vadd.f32 %v635, %v643
  %v646 = vtanh.pop %v645
  %648 = vrot.lane.b32.xlu0 %v646, 32
  %v649 = vpop.permute.xlu0 %648
  %v651 = vmul.f32 %v630, %v649
  %653 = vrot.lane.b32.xlu0 %v651, 64
  %v654 = vpop.permute.xlu0 %653
  %v655 = vsel %vm129, %v654, 0
  %657 = vmatprep.subr.mxu0 0.0
  %658 = vmatpush1.msra.mxu0 0.0
  %659 = vmatprep.subr.mxu0 0.0
  %660 = vmatpush1.msra.mxu0 0.0
  %661 = vmatprep.subr.mxu0 0.0
  %662 = vmatpush1.msra.mxu0 0.0
  %663 = vmatprep.subr.mxu0 0.0
  %664 = vmatpush1.msra.mxu0 0.0
  %665 = vmatprep.subr.mxu0 0.0
  %666 = vmatpush1.msra.mxu0 0.0
  %667 = vmatprep.subr.mxu0 0.0
  %668 = vmatpush1.msra.mxu0 0.0
  %669 = vmatprep.subr.mxu0 0.0
  %670 = vmatpush1.msra.mxu0 0.0
  %671 = vmatprep.subr.mxu0 0.0
  %672 = vmatpush1.msra.mxu0 0.0
  %673 = vmatprep.subr.mxu0 0.0
  %674 = vmatpush1.msra.mxu0 0.0
  %675 = vmatprep.subr.mxu0 0.0
  %676 = vmatpush1.msra.mxu0 0.0
  %677 = vmatprep.subr.mxu0 0.0
  %678 = vmatpush1.msra.mxu0 0.0
  %679 = vmatprep.subr.mxu0 0.0
  %680 = vmatpush1.msra.mxu0 0.0
  %681 = vmatprep.subr.mxu0 0.0
  %682 = vmatpush1.msra.mxu0 %v128
  %683 = vmatprep.subr.mxu0 0.0
  %684 = vmatpush1.msra.mxu0 %v127
  %685 = vmatprep.subr.mxu0 0.0
  %686 = vmatpush1.msra.mxu0 %v126
  %687 = vmatprep.subr.mxu0 0.0
  %688 = vmatpush1.msra.mxu0 %v125
  %689 = vmatprep.subr.mxu0 0.0
  %690 = vmatpush2.msra.mxu0 0.0
  %691 = vmatprep.subr.mxu0 0.0
  %692 = vmatpush2.msra.mxu0 0.0
  %693 = vmatprep.subr.mxu0 0.0
  %694 = vmatpush2.msra.mxu0 0.0
  %695 = vmatprep.subr.mxu0 0.0
  %696 = vmatpush2.msra.mxu0 0.0
  %697 = vmatprep.subr.mxu0 0.0
  %698 = vmatpush2.msra.mxu0 0.0
  %699 = vmatprep.subr.mxu0 0.0
  %700 = vmatpush2.msra.mxu0 0.0
  %701 = vmatprep.subr.mxu0 0.0
  %702 = vmatpush2.msra.mxu0 0.0
  %703 = vmatprep.subr.mxu0 0.0
  %704 = vmatpush2.msra.mxu0 0.0
  %705 = vmatprep.subr.mxu0 0.0
  %706 = vmatpush2.msra.mxu0 0.0
  %707 = vmatprep.subr.mxu0 0.0
  %708 = vmatpush2.msra.mxu0 0.0
  %709 = vmatprep.subr.mxu0 0.0
  %710 = vmatpush2.msra.mxu0 0.0
  %711 = vmatprep.subr.mxu0 0.0
  %712 = vmatpush2.msra.mxu0 0.0
  %713 = vmatprep.subr.mxu0 0.0
  %714 = vmatpush2.msra.mxu0 0.0
  %715 = vmatprep.subr.mxu0 0.0
  %716 = vmatpush2.msra.mxu0 0.0
  %717 = vmatprep.subr.mxu0 0.0
  %718 = vmatpush2.msra.mxu0 0.0
  %719 = vmatprep.subr.mxu0 0.0
  %720 = vmatpush2.msra.mxu0 0.0
  %721 = vmatprep.mubr.f32.mxu0 0.0
  %722 = vmatmul.mubr.f32.gmra.mxu0 %v655
  %v723 = vpop.f32.mrf.mxu0
  %v724 = vadd.f32 0.0, %v723
  %v725 = vpop.f32.mrf.mxu0
  %726 = vdwg.mxu0
  %v728 = vrot.slane %v724, 6
  %v730 = vadd.f32 %v122, %v728
  %v731 = vxor.u32 %v730, 2147483648
  %v732 = vmul.f32 %v731, 1.442695
  %v733 = vpow.pop %v732
  %v734 = vadd.f32 %v733, 1.0
  %v735 = vrcp.pop %v734
  %v736 = vmul.f32 1.0, %v735
  %v737 = vtanh.pop %v730
  %v739 = vrot.slane %v645, 6
  %v741 = vmul.f32 %v736, %v739
  %743 = vrot.lane.b32.xlu0 %v737, 32
  %v744 = vpop.permute.xlu0 %743
  %v746 = vmul.f32 %v736, %v744
  %748 = vrot.lane.b32.xlu0 %v746, 32
  %v749 = vpop.permute.xlu0 %748
  %v751 = vadd.f32 %v741, %v749
  %v752 = vtanh.pop %v751
  %754 = vrot.lane.b32.xlu0 %v752, 32
  %v755 = vpop.permute.xlu0 %754
  %v757 = vmul.f32 %v736, %v755
  %v759 = vrot.slane %v757, 2
  %760 = vrot.lane.b32.xlu0 %v759, 64
  %v761 = vpop.permute.xlu0 %760
  %v762 = vsel %vm129, %v761, 0
  %764 = vmatprep.subr.mxu0 0.0
  %765 = vmatpush1.msra.mxu0 0.0
  %766 = vmatprep.subr.mxu0 0.0
  %767 = vmatpush1.msra.mxu0 0.0
  %768 = vmatprep.subr.mxu0 0.0
  %769 = vmatpush1.msra.mxu0 0.0
  %770 = vmatprep.subr.mxu0 0.0
  %771 = vmatpush1.msra.mxu0 0.0
  %772 = vmatprep.subr.mxu0 0.0
  %773 = vmatpush1.msra.mxu0 0.0
  %774 = vmatprep.subr.mxu0 0.0
  %775 = vmatpush1.msra.mxu0 0.0
  %776 = vmatprep.subr.mxu0 0.0
  %777 = vmatpush1.msra.mxu0 0.0
  %778 = vmatprep.subr.mxu0 0.0
  %779 = vmatpush1.msra.mxu0 0.0
  %780 = vmatprep.subr.mxu0 0.0
  %781 = vmatpush1.msra.mxu0 0.0
  %782 = vmatprep.subr.mxu0 0.0
  %783 = vmatpush1.msra.mxu0 0.0
  %784 = vmatprep.subr.mxu0 0.0
  %785 = vmatpush1.msra.mxu0 0.0
  %786 = vmatprep.subr.mxu0 0.0
  %787 = vmatpush1.msra.mxu0 0.0
  %788 = vmatprep.subr.mxu0 0.0
  %789 = vmatpush1.msra.mxu0 %v128
  %790 = vmatprep.subr.mxu0 0.0
  %791 = vmatpush1.msra.mxu0 %v127
  %792 = vmatprep.subr.mxu0 0.0
  %793 = vmatpush1.msra.mxu0 %v126
  %794 = vmatprep.subr.mxu0 0.0
  %795 = vmatpush1.msra.mxu0 %v125
  %796 = vmatprep.subr.mxu0 0.0
  %797 = vmatpush2.msra.mxu0 0.0
  %798 = vmatprep.subr.mxu0 0.0
  %799 = vmatpush2.msra.mxu0 0.0
  %800 = vmatprep.subr.mxu0 0.0
  %801 = vmatpush2.msra.mxu0 0.0
  %802 = vmatprep.subr.mxu0 0.0
  %803 = vmatpush2.msra.mxu0 0.0
  %804 = vmatprep.subr.mxu0 0.0
  %805 = vmatpush2.msra.mxu0 0.0
  %806 = vmatprep.subr.mxu0 0.0
  %807 = vmatpush2.msra.mxu0 0.0
  %808 = vmatprep.subr.mxu0 0.0
  %809 = vmatpush2.msra.mxu0 0.0
  %810 = vmatprep.subr.mxu0 0.0
  %811 = vmatpush2.msra.mxu0 0.0
  %812 = vmatprep.subr.mxu0 0.0
  %813 = vmatpush2.msra.mxu0 0.0
  %814 = vmatprep.subr.mxu0 0.0
  %815 = vmatpush2.msra.mxu0 0.0
  %816 = vmatprep.subr.mxu0 0.0
  %817 = vmatpush2.msra.mxu0 0.0
  %818 = vmatprep.subr.mxu0 0.0
  %819 = vmatpush2.msra.mxu0 0.0
  %820 = vmatprep.subr.mxu0 0.0
  %821 = vmatpush2.msra.mxu0 0.0
  %822 = vmatprep.subr.mxu0 0.0
  %823 = vmatpush2.msra.mxu0 0.0
  %824 = vmatprep.subr.mxu0 0.0
  %825 = vmatpush2.msra.mxu0 0.0
  %826 = vmatprep.subr.mxu0 0.0
  %827 = vmatpush2.msra.mxu0 0.0
  %828 = vmatprep.mubr.f32.mxu0 0.0
  %829 = vmatmul.mubr.f32.gmra.mxu0 %v762
  %v830 = vpop.f32.mrf.mxu0
  %v831 = vadd.f32 0.0, %v830
  %v832 = vpop.f32.mrf.mxu0
  %833 = vdwg.mxu0
  %v835 = vrot.slane %v831, 4
  %v837 = vadd.f32 %v122, %v835
  %v838 = vxor.u32 %v837, 2147483648
  %v839 = vmul.f32 %v838, 1.442695
  %v840 = vpow.pop %v839
  %v841 = vadd.f32 %v840, 1.0
  %v842 = vrcp.pop %v841
  %v843 = vmul.f32 1.0, %v842
  %v844 = vtanh.pop %v837
  %v846 = vrot.slane %v751, 6
  %v848 = vmul.f32 %v843, %v846
  %850 = vrot.lane.b32.xlu0 %v844, 32
  %v851 = vpop.permute.xlu0 %850
  %v853 = vmul.f32 %v843, %v851
  %855 = vrot.lane.b32.xlu0 %v853, 32
  %v856 = vpop.permute.xlu0 %855
  %v858 = vadd.f32 %v848, %v856
  %v859 = vtanh.pop %v858
  %861 = vrot.lane.b32.xlu0 %v859, 32
  %v862 = vpop.permute.xlu0 %861
  %v864 = vmul.f32 %v843, %v862
  %v866 = vrot.slane %v864, 4
  %867 = vrot.lane.b32.xlu0 %v866, 64
  %v868 = vpop.permute.xlu0 %867
  %v869 = vsel %vm129, %v868, 0
  %871 = vmatprep.subr.mxu0 0.0
  %872 = vmatpush1.msra.mxu0 0.0
  %873 = vmatprep.subr.mxu0 0.0
  %874 = vmatpush1.msra.mxu0 0.0
  %875 = vmatprep.subr.mxu0 0.0
  %876 = vmatpush1.msra.mxu0 0.0
  %877 = vmatprep.subr.mxu0 0.0
  %878 = vmatpush1.msra.mxu0 0.0
  %879 = vmatprep.subr.mxu0 0.0
  %880 = vmatpush1.msra.mxu0 0.0
  %881 = vmatprep.subr.mxu0 0.0
  %882 = vmatpush1.msra.mxu0 0.0
  %883 = vmatprep.subr.mxu0 0.0
  %884 = vmatpush1.msra.mxu0 0.0
  %885 = vmatprep.subr.mxu0 0.0
  %886 = vmatpush1.msra.mxu0 0.0
  %887 = vmatprep.subr.mxu0 0.0
  %888 = vmatpush1.msra.mxu0 0.0
  %889 = vmatprep.subr.mxu0 0.0
  %890 = vmatpush1.msra.mxu0 0.0
  %891 = vmatprep.subr.mxu0 0.0
  %892 = vmatpush1.msra.mxu0 0.0
  %893 = vmatprep.subr.mxu0 0.0
  %894 = vmatpush1.msra.mxu0 0.0
  %895 = vmatprep.subr.mxu0 0.0
  %896 = vmatpush1.msra.mxu0 %v128
  %897 = vmatprep.subr.mxu0 0.0
  %898 = vmatpush1.msra.mxu0 %v127
  %899 = vmatprep.subr.mxu0 0.0
  %900 = vmatpush1.msra.mxu0 %v126
  %901 = vmatprep.subr.mxu0 0.0
  %902 = vmatpush1.msra.mxu0 %v125
  %903 = vmatprep.subr.mxu0 0.0
  %904 = vmatpush2.msra.mxu0 0.0
  %905 = vmatprep.subr.mxu0 0.0
  %906 = vmatpush2.msra.mxu0 0.0
  %907 = vmatprep.subr.mxu0 0.0
  %908 = vmatpush2.msra.mxu0 0.0
  %909 = vmatprep.subr.mxu0 0.0
  %910 = vmatpush2.msra.mxu0 0.0
  %911 = vmatprep.subr.mxu0 0.0
  %912 = vmatpush2.msra.mxu0 0.0
  %913 = vmatprep.subr.mxu0 0.0
  %914 = vmatpush2.msra.mxu0 0.0
  %915 = vmatprep.subr.mxu0 0.0
  %916 = vmatpush2.msra.mxu0 0.0
  %917 = vmatprep.subr.mxu0 0.0
  %918 = vmatpush2.msra.mxu0 0.0
  %919 = vmatprep.subr.mxu0 0.0
  %920 = vmatpush2.msra.mxu0 0.0
  %921 = vmatprep.subr.mxu0 0.0
  %922 = vmatpush2.msra.mxu0 0.0
  %923 = vmatprep.subr.mxu0 0.0
  %924 = vmatpush2.msra.mxu0 0.0
  %925 = vmatprep.subr.mxu0 0.0
  %926 = vmatpush2.msra.mxu0 0.0
  %927 = vmatprep.subr.mxu0 0.0
  %928 = vmatpush2.msra.mxu0 0.0
  %929 = vmatprep.subr.mxu0 0.0
  %930 = vmatpush2.msra.mxu0 0.0
  %931 = vmatprep.subr.mxu0 0.0
  %932 = vmatpush2.msra.mxu0 0.0
  %933 = vmatprep.subr.mxu0 0.0
  %934 = vmatpush2.msra.mxu0 0.0
  %935 = vmatprep.mubr.f32.mxu0 0.0
  %936 = vmatmul.mubr.f32.gmra.mxu0 %v869
  %v937 = vpop.f32.mrf.mxu0
  %v938 = vadd.f32 0.0, %v937
  %v939 = vpop.f32.mrf.mxu0
  %940 = vdwg.mxu0
  %v942 = vrot.slane %v938, 2
  %v944 = vadd.f32 %v122, %v942
  %v945 = vxor.u32 %v944, 2147483648
  %v946 = vmul.f32 %v945, 1.442695
  %v947 = vpow.pop %v946
  %v948 = vadd.f32 %v947, 1.0
  %v949 = vrcp.pop %v948
  %v950 = vmul.f32 1.0, %v949
  %v951 = vtanh.pop %v944
  %v953 = vrot.slane %v858, 6
  %v955 = vmul.f32 %v950, %v953
  %957 = vrot.lane.b32.xlu0 %v951, 32
  %v958 = vpop.permute.xlu0 %957
  %v960 = vmul.f32 %v950, %v958
  %962 = vrot.lane.b32.xlu0 %v960, 32
  %v963 = vpop.permute.xlu0 %962
  %v965 = vadd.f32 %v955, %v963
  %v966 = vtanh.pop %v965
  %968 = vrot.lane.b32.xlu0 %v966, 32
  %v969 = vpop.permute.xlu0 %968
  %v971 = vmul.f32 %v950, %v969
  %973 = vrot.lane.b32.xlu0 %v971, 64
  %v974 = vpop.permute.xlu0 %973
  %vm976 = vcmask 261126
  %v977 = vsel %vm976, %v974, 0.0
  %978 = vadd.xlane.f32.xlu0 %v977
  %v979 = vpop.xlane.xlu0 %978
  %v980 = vrcp.pop 32.0
  %v981 = vmul.f32 %v979, %v980
  %v982 = vsub.f32 %v971, %v981
  %v983 = vmul.f32 %v982, %v982
  %985 = vrot.lane.b32.xlu0 %v983, 64
  %v986 = vpop.permute.xlu0 %985
  %v988 = vsel %vm976, %v986, 0.0
  %989 = vadd.xlane.f32.xlu0 %v988
  %v990 = vpop.xlane.xlu0 %989
  %v991 = vmul.f32 %v990, %v980
  %v992 = vadd.f32 %v991, 1e-05
  %v993 = vrsqrt.pop %v992
  %v994 = vmul.f32 %v982, %v993
  %v995 = vld [vmem:[%s4] sm:$0x1]
  %v997 = vlaneseq
  %v998 = vshrl.u32 %v997, 7
  %v999 = vsub.s32 0, %v998
  %v1000 = vrot.slane %v995, %v999
  %1001 = vrot.lane.b32.xlu0 %v1000, 64
  %v1002 = vpop.permute.xlu0 %1001
  %v1004 = vmul.f32 %v994, %v1002
  %v1005 = vld [vmem:[%s5] sm:$0x1]
  %v1007 = vlaneseq
  %v1008 = vshrl.u32 %v1007, 7
  %v1009 = vsub.s32 0, %v1008
  %v1010 = vrot.slane %v1005, %v1009
  %1011 = vrot.lane.b32.xlu0 %v1010, 64
  %v1012 = vpop.permute.xlu0 %1011
  %v1014 = vadd.f32 %v1004, %v1012
  %v1015 = vld [vmem:[%s6] sm:$0xff]
  %v1016 = vld [vmem:[%s6 + $0x8] sm:$0xff]
  %v1017 = vld [vmem:[%s6 + $0x10] sm:$0xff]
  %v1018 = vld [vmem:[%s6 + $0x18] sm:$0xff]
  %v1019 = vld [vmem:[%s7] sm:$0x1]
  %v1021 = vlaneseq
  %v1022 = vshrl.u32 %v1021, 7
  %v1023 = vsub.s32 0, %v1022
  %v1024 = vrot.slane %v1019, %v1023
  %v1027 = vrot.slane %v1014, 6
  %1028 = vrot.lane.b32.xlu0 %v1027, 64
  %v1029 = vpop.permute.xlu0 %1028
  %v1030 = vsel %vm129, %v1029, 0
  %1032 = vmatprep.subr.mxu0 0.0
  %1033 = vmatpush1.msra.mxu0 0.0
  %1034 = vmatprep.subr.mxu0 0.0
  %1035 = vmatpush1.msra.mxu0 0.0
  %1036 = vmatprep.subr.mxu0 0.0
  %1037 = vmatpush1.msra.mxu0 0.0
  %1038 = vmatprep.subr.mxu0 0.0
  %1039 = vmatpush1.msra.mxu0 0.0
  %1040 = vmatprep.subr.mxu0 0.0
  %1041 = vmatpush1.msra.mxu0 0.0
  %1042 = vmatprep.subr.mxu0 0.0
  %1043 = vmatpush1.msra.mxu0 0.0
  %1044 = vmatprep.subr.mxu0 0.0
  %1045 = vmatpush1.msra.mxu0 0.0
  %1046 = vmatprep.subr.mxu0 0.0
  %1047 = vmatpush1.msra.mxu0 0.0
  %1048 = vmatprep.subr.mxu0 0.0
  %1049 = vmatpush1.msra.mxu0 0.0
  %1050 = vmatprep.subr.mxu0 0.0
  %1051 = vmatpush1.msra.mxu0 0.0
  %1052 = vmatprep.subr.mxu0 0.0
  %1053 = vmatpush1.msra.mxu0 0.0
  %1054 = vmatprep.subr.mxu0 0.0
  %1055 = vmatpush1.msra.mxu0 0.0
  %1056 = vmatprep.subr.mxu0 0.0
  %1057 = vmatpush1.msra.mxu0 %v1018
  %1058 = vmatprep.subr.mxu0 0.0
  %1059 = vmatpush1.msra.mxu0 %v1017
  %1060 = vmatprep.subr.mxu0 0.0
  %1061 = vmatpush1.msra.mxu0 %v1016
  %1062 = vmatprep.subr.mxu0 0.0
  %1063 = vmatpush1.msra.mxu0 %v1015
  %1064 = vmatprep.subr.mxu0 0.0
  %1065 = vmatpush2.msra.mxu0 0.0
  %1066 = vmatprep.subr.mxu0 0.0
  %1067 = vmatpush2.msra.mxu0 0.0
  %1068 = vmatprep.subr.mxu0 0.0
  %1069 = vmatpush2.msra.mxu0 0.0
  %1070 = vmatprep.subr.mxu0 0.0
  %1071 = vmatpush2.msra.mxu0 0.0
  %1072 = vmatprep.subr.mxu0 0.0
  %1073 = vmatpush2.msra.mxu0 0.0
  %1074 = vmatprep.subr.mxu0 0.0
  %1075 = vmatpush2.msra.mxu0 0.0
  %1076 = vmatprep.subr.mxu0 0.0
  %1077 = vmatpush2.msra.mxu0 0.0
  %1078 = vmatprep.subr.mxu0 0.0
  %1079 = vmatpush2.msra.mxu0 0.0
  %1080 = vmatprep.subr.mxu0 0.0
  %1081 = vmatpush2.msra.mxu0 0.0
  %1082 = vmatprep.subr.mxu0 0.0
  %1083 = vmatpush2.msra.mxu0 0.0
  %1084 = vmatprep.subr.mxu0 0.0
  %1085 = vmatpush2.msra.mxu0 0.0
  %1086 = vmatprep.subr.mxu0 0.0
  %1087 = vmatpush2.msra.mxu0 0.0
  %1088 = vmatprep.subr.mxu0 0.0
  %1089 = vmatpush2.msra.mxu0 0.0
  %1090 = vmatprep.subr.mxu0 0.0
  %1091 = vmatpush2.msra.mxu0 0.0
  %1092 = vmatprep.subr.mxu0 0.0
  %1093 = vmatpush2.msra.mxu0 0.0
  %1094 = vmatprep.subr.mxu0 0.0
  %1095 = vmatpush2.msra.mxu0 0.0
  %1096 = vmatprep.mubr.f32.mxu0 0.0
  %1097 = vmatmul.mubr.f32.gmra.mxu0 %v1030
  %v1098 = vpop.f32.mrf.mxu0
  %v1099 = vadd.f32 %v1024, %v1098
  %v1100 = vpop.f32.mrf.mxu0
  %1101 = vdwg.mxu0
  %vm1102 = vcmask 9216
  %1103 = vst.msk [vmem:[%s8] sm:$0x3] %vm1102, %v1099
  // Predicated region
  $region34: #{prediction_network_forward.1} parent=0 // pred_check
    _
  $region35: #{prediction_network_forward.1} parent=0 // pred_check_branch
    %1105 = sbr.rel (0) target = $region37
  $region36: #{prediction_network_forward.1} parent=0 // pred_region
    _
  $region37: #{prediction_network_forward.1} parent=0 // pred_fallthru
    _
  // Predicated region
  $region38: #{prediction_network_forward.1} parent=0 // pred_check
    _
  $region39: #{prediction_network_forward.1} parent=0 // pred_check_branch
    %1107 = sbr.rel (0) target = $region41
  $region40: #{prediction_network_forward.1} parent=0 // pred_region
    _
  $region41: #{prediction_network_forward.1} parent=0 // pred_fallthru
    _

</llo_original>
